<compile_context>
chip_gen: v7x
topology: tpu7x:2x2x1
jax: 0.10.0
libtpu: 0.0.40
codegen_flags: <defaults>
</compile_context>

<pallas_src>
import math

import jax
import jax.numpy as jnp
from jax import lax
from jax.experimental import pallas as pl
from jax.experimental.pallas import tpu as pltpu


COMPUTE_DTYPE = jnp.bfloat16     # activations / weights (f32 accumulation)
LANE = 128
TILE_CAP = 1024                  # max output tile width (lanes)
VMEM_BUDGET = 16 * 1024 * 1024   # per-grid-step VMEM estimate target
VMEM_LIMIT = 32 * 1024 * 1024    # scoped-VMEM limit handed to Mosaic

RATIOS = [8, 8, 2, 2]


def _mosaic_params():
    return pltpu.CompilerParams(
        dimension_semantics=("parallel", "parallel"),
        vmem_limit_bytes=VMEM_LIMIT)


# ---------------------------------------------------------------------------
# Tiling helper: budget-aware, lane-dense, pad-and-crop
# ---------------------------------------------------------------------------
def _choose_tile(Lout, per_lane_bytes, fixed_bytes=0):
    """Pick an output-tile width.

    Returns (T, nL, tiled, Lout_pad):
      T        : tile width (lanes) seen by the kernel
      nL       : number of tiles along the length axis
      tiled    : whether the halo'd two-block tiling path is used
      Lout_pad : padded output length (= nL*T when tiled, else Lout)
    T is the largest multiple of 128 (capped at TILE_CAP) whose per-grid-step
    VMEM estimate (per_lane_bytes*T + fixed_bytes) stays under VMEM_BUDGET.
    """
    Lr = -(-Lout // LANE) * LANE                       # lane-rounded length
    avail = VMEM_BUDGET - fixed_bytes
    t_fit = max(LANE, (avail // max(per_lane_bytes, 1)) // LANE * LANE)
    T = min(TILE_CAP, t_fit, Lr)
    if Lout <= T:                                      # one block: untiled path
        return Lout, 1, False, Lout
    if Lout == Lr:                                     # lane-aligned: prefer a
        for cand in range(T, T // 2 - 1, -LANE):       # divisor (avoids crop)
            if cand >= LANE and Lout % cand == 0:
                T = cand
                break
    nL = -(-Lout // T)
    return T, nL, True, nL * T


def _act(v, dtype, lrelu):
    """Optional LeakyReLU(0.2) in f32, then cast to the storage dtype."""
    if lrelu:
        v = v.astype(jnp.float32)
        v = jnp.where(v >= 0, v, 0.2 * v)
    return v.astype(dtype)


# ---------------------------------------------------------------------------
# Generic dilated Conv1d (valid) kernel: im2col scratch + one deep MXU matmul
# ---------------------------------------------------------------------------
def _make_conv_kernel(K, dilation, T, tiled, pre_lrelu, post_tanh):
    def kernel(*refs):
        if tiled:
            x_main, x_next, w_ref, b_ref, o_ref, xcol_ref = refs
        else:
            x_main, w_ref, b_ref, o_ref, xcol_ref = refs
        Cin = x_main.shape[0]

        # Build the (K*Cin, T) im2col operand in VMEM (activation fused in).
        for t in range(K):
            s = t * dilation
            rows = slice(t * Cin, (t + 1) * Cin)
            if tiled:
                # tap window spans this tile's block and the first s columns
                # of the next block (the halo).
                xcol_ref[rows, 0:T - s] = _act(x_main[:, s:T], xcol_ref.dtype,
                                               pre_lrelu)
                if s:
                    xcol_ref[rows, T - s:T] = _act(x_next[:, 0:s],
                                                   xcol_ref.dtype, pre_lrelu)
            else:
                xcol_ref[rows, :] = _act(x_main[:, s:s + T], xcol_ref.dtype,
                                         pre_lrelu)

        # One deep matmul over the folded (tap, cin) contraction (f32 acc).
        acc = jnp.dot(w_ref[...], xcol_ref[...],
                      preferred_element_type=jnp.float32)
        y = acc + b_ref[...]
        if post_tanh:
            y = jnp.tanh(y)
        o_ref[...] = y.astype(o_ref.dtype)

    return kernel


def pallas_conv1d(x_pad, w_fold, bias, *, K, Lout, dilation=1,
                  pre_lrelu=False, post_tanh=False, out_dtype=None):
    """VALID dilated Conv1d on a pre-padded input.

    x_pad : (B, Cin, Lp) with Lp >= Lout + (K-1)*dilation
    w_fold: (Cout, K*Cin) tap-folded weight, row layout [tap*Cin + cin], bf16
    bias  : (Cout, 1) float32
    """
    out_dtype = COMPUTE_DTYPE if out_dtype is None else out_dtype
    x_pad = x_pad.astype(COMPUTE_DTYPE)
    B, Cin, Lp = x_pad.shape
    Cout, KC = w_fold.shape
    assert KC == K * Cin
    halo = (K - 1) * dilation
    assert Lp >= Lout + halo

    # VMEM budget estimate: double-buffered x main/next, output, im2col scratch
    # (per lane) + double-buffered weights (fixed).
    out_bytes = jnp.dtype(out_dtype).itemsize
    per_lane = 8 * Cin + 2 * out_bytes * Cout + 2 * K * Cin
    fixed = 2 * (Cout * KC * 2 + Cout * 4)
    T, nL, tiled, Lout_pad = _choose_tile(Lout, per_lane, fixed)

    kernel = _make_conv_kernel(K, dilation, T, tiled, pre_lrelu, post_tanh)

    if tiled:
        assert halo <= T
        need = (nL + 1) * T                 # so block j+1 always exists
        if Lp < need:
            x_pad = jnp.pad(x_pad, ((0, 0), (0, 0), (0, need - Lp)))
        elif Lp > need:
            x_pad = x_pad[:, :, :need]
        x_specs = [pl.BlockSpec((None, Cin, T), lambda b, j: (b, 0, j)),
                   pl.BlockSpec((None, Cin, T), lambda b, j: (b, 0, j + 1))]
        x_args = (x_pad, x_pad)
    else:
        Lp_use = Lout + halo
        if Lp > Lp_use:
            x_pad = x_pad[:, :, :Lp_use]
        x_specs = [pl.BlockSpec((None, Cin, Lp_use), lambda b, j: (b, 0, 0))]
        x_args = (x_pad,)

    w_specs = [pl.BlockSpec((Cout, KC), lambda b, j: (0, 0)),
               pl.BlockSpec((Cout, 1), lambda b, j: (0, 0))]

    out = pl.pallas_call(
        kernel,
        out_shape=jax.ShapeDtypeStruct((B, Cout, Lout_pad), out_dtype),
        grid=(B, nL),
        in_specs=x_specs + w_specs,
        out_specs=pl.BlockSpec((None, Cout, T), lambda b, j: (b, 0, j)),
        scratch_shapes=[pltpu.VMEM((K * Cin, T), COMPUTE_DTYPE)],
        compiler_params=_mosaic_params(),
    )(*x_args, w_fold, bias)
    if Lout_pad != Lout:
        out = out[:, :, :Lout]
    return out


# ---------------------------------------------------------------------------
# Polyphase ConvTranspose1d (pre-LeakyReLU fused): weight folding + conv
# ---------------------------------------------------------------------------
def _polyphase_geometry(K, stride, padding, output_padding):
    # TODO(synk): output_padding > 0 (odd ratios) would need a ragged last
    # phase; the Generator's ratios [8, 8, 2, 2] always give output_padding=0.
    assert output_padding == 0 and K % stride == 0
    s = stride
    Kp = K // s
    PL = K - 1 - padding                       # left pad of the zero-upsampled form
    k0 = [(PL - phi) % s for phi in range(s)]
    c = [(phi + k0[phi] - PL) // s for phi in range(s)]
    cmin, cmax = min(c), max(c)
    Keff = Kp + (cmax - cmin)
    pad_l, pad_r = -cmin, (Kp - 1) + cmax
    assert pad_l >= 0 and pad_r >= 0
    return Kp, k0, c, cmin, Keff, pad_l, pad_r


def _fold_conv(w, b):
    """PyTorch Conv1d weight (Cout, Cin, K) -> tap-folded (Cout, K*Cin) bf16."""
    Cout, Cin, K = w.shape
    w_fold = jnp.transpose(w, (0, 2, 1)).reshape(Cout, K * Cin)
    return w_fold.astype(COMPUTE_DTYPE), b.reshape(Cout, 1).astype(jnp.float32)


def _fold_convT_polyphase(w_t, b, stride, padding, output_padding):
    """PyTorch ConvTranspose1d weight (Cin, Cout, K) -> weight of an equivalent
    dense Conv1d with stride*Cout output channels on the un-upsampled input."""
    Cin, Cout, K = w_t.shape
    s = stride
    Kp, k0, c, cmin, Keff, _, _ = _polyphase_geometry(K, s, padding,
                                                      output_padding)
    # forward-conv equivalent weight: w_conv[co, ci, k] = w_t[ci, co, K-1-k]
    w_conv = jnp.transpose(jnp.flip(w_t, axis=2), (1, 0, 2))
    wph = jnp.zeros((s, Cout, Cin, Keff), jnp.float32)
    for phi in range(s):
        u = c[phi] - cmin
        for t in range(Kp):
            wph = wph.at[phi, :, :, u + t].set(w_conv[:, :, k0[phi] + t * s])
    w_fold = jnp.transpose(wph.reshape(s * Cout, Cin, Keff), (0, 2, 1))
    w_fold = w_fold.reshape(s * Cout, Keff * Cin).astype(COMPUTE_DTYPE)
    bias = jnp.tile(b, (s,)).reshape(s * Cout, 1).astype(jnp.float32)
    return w_fold, bias


def pallas_conv_transpose1d(x, w_fold, bias, *, stride, kernel_size, padding,
                            output_padding=0):
    """ConvTranspose1d as a polyphase dense Conv1d + phase interleave.
    The LeakyReLU(0.2) preceding every upsampler is fused into the kernel."""
    B, Cin, L = x.shape
    s = stride
    _, _, _, _, Keff, pad_l, pad_r = _polyphase_geometry(
        kernel_size, s, padding, output_padding)
    Cout = w_fold.shape[0] // s
    assert w_fold.shape == (s * Cout, Keff * Cin)
    xz = jnp.pad(x, ((0, 0), (0, 0), (pad_l, pad_r)))
    y = pallas_conv1d(xz, w_fold, bias, K=Keff, Lout=L, pre_lrelu=True)
    # interleave phases: channel (phi*Cout + co) at position q -> (co, q*s+phi)
    # TODO(synk): the interleave could be written lane-strided inside the
    # kernel to save one wrapper-side HBM transpose of the activation.
    y = y.reshape(B, s, Cout, L).transpose(0, 2, 3, 1).reshape(B, Cout, L * s)
    return y


# ---------------------------------------------------------------------------
# Fused ResnetBlock kernel: shortcut 1x1 + dilated 3-tap + 1x1 + residual add
# ---------------------------------------------------------------------------
def _make_resblock_kernel(d, C, T, tiled):
    def kernel(*refs):
        if tiled:
            (xr_main, xr_next, wsc, bsc, wc1, bc1, wc2, bc2,
             o_ref, xc_ref, xcol_ref, h1_ref) = refs
        else:
            (xr_full, wsc, bsc, wc1, bc1, wc2, bc2,
             o_ref, xc_ref, xcol_ref, h1_ref) = refs

        # xr_* hold the ReflectionPad1d(d)-padded input.  Output column q of
        # this tile uses xr columns q, q+d, q+2d (the 3 dilated taps); the raw
        # x tile (shortcut input) is the d-shifted (tap-1) window.
        if tiled:
            xc_ref[:, 0:T - d] = xr_main[:, d:T]
            xc_ref[:, T - d:T] = xr_next[:, 0:d]
            for t in range(3):
                s = t * d
                rows = slice(t * C, (t + 1) * C)
                xcol_ref[rows, 0:T - s] = _act(xr_main[:, s:T],
                                               xcol_ref.dtype, True)
                if s:
                    xcol_ref[rows, T - s:T] = _act(xr_next[:, 0:s],
                                                   xcol_ref.dtype, True)
        else:
            xc_ref[...] = xr_full[:, d:d + T]
            for t in range(3):
                s = t * d
                xcol_ref[t * C:(t + 1) * C, :] = _act(xr_full[:, s:s + T],
                                                      xcol_ref.dtype, True)

        # dilated k=3 conv + LeakyReLU (one deep matmul over the 3*C contraction)
        h1 = jnp.dot(wc1[...], xcol_ref[...],
                     preferred_element_type=jnp.float32) + bc1[...]
        h1_ref[...] = _act(h1, h1_ref.dtype, True)

        # 1x1 conv of the block branch + 1x1 shortcut conv + residual add (f32)
        yb = jnp.dot(wc2[...], h1_ref[...],
                     preferred_element_type=jnp.float32) + bc2[...]
        ys = jnp.dot(wsc[...], xc_ref[...],
                     preferred_element_type=jnp.float32) + bsc[...]
        o_ref[...] = (yb + ys).astype(o_ref.dtype)

    return kernel


def pallas_resnet_block(x, blk, *, dilation):
    """Fused ResnetBlock: shortcut(x) + conv1(lrelu(conv3(lrelu(pad(x)))))."""
    B, C, L = x.shape
    d = dilation
    w_sc, b_sc = blk["sc"]
    w_c1, b_c1 = blk["c1"]
    w_c2, b_c2 = blk["c2"]
    assert w_sc.shape == (C, C) and w_c1.shape == (C, 3 * C) and w_c2.shape == (C, C)

    x = x.astype(COMPUTE_DTYPE)
    # VMEM estimate: x main+next (8C) + output (4C) + 3 scratches (10C) per lane.
    per_lane = 22 * C
    fixed = 2 * (2 * (C * C) * 2 + (C * 3 * C) * 2 + 3 * C * 4)
    T, nL, tiled, L_pad = _choose_tile(L, per_lane, fixed)

    # ReflectionPad1d(d).  TODO(synk): the edge reflection could be built inside
    # the first/last tile of the kernel to also drop this wrapper-side HBM copy.
    xr = jnp.pad(x, ((0, 0), (0, 0), (d, d)), mode="reflect")

    if tiled:
        assert 2 * d <= T
        need = (nL + 1) * T
        xr = jnp.pad(xr, ((0, 0), (0, 0), (0, need - (L + 2 * d))))
        x_specs = [pl.BlockSpec((None, C, T), lambda b, j: (b, 0, j)),
                   pl.BlockSpec((None, C, T), lambda b, j: (b, 0, j + 1))]
        x_args = (xr, xr)
    else:
        x_specs = [pl.BlockSpec((None, C, L + 2 * d), lambda b, j: (b, 0, 0))]
        x_args = (xr,)

    w_specs = [pl.BlockSpec((C, C), lambda b, j: (0, 0)),
               pl.BlockSpec((C, 1), lambda b, j: (0, 0)),
               pl.BlockSpec((C, 3 * C), lambda b, j: (0, 0)),
               pl.BlockSpec((C, 1), lambda b, j: (0, 0)),
               pl.BlockSpec((C, C), lambda b, j: (0, 0)),
               pl.BlockSpec((C, 1), lambda b, j: (0, 0))]

    kernel = _make_resblock_kernel(d, C, T, tiled)
    out = pl.pallas_call(
        kernel,
        out_shape=jax.ShapeDtypeStruct((B, C, L_pad), COMPUTE_DTYPE),
        grid=(B, nL),
        in_specs=x_specs + w_specs,
        out_specs=pl.BlockSpec((None, C, T), lambda b, j: (b, 0, j)),
        scratch_shapes=[pltpu.VMEM((C, T), COMPUTE_DTYPE),       # raw x tile
                        pltpu.VMEM((3 * C, T), COMPUTE_DTYPE),   # im2col(lrelu x)
                        pltpu.VMEM((C, T), COMPUTE_DTYPE)],      # lrelu(conv3)
        compiler_params=_mosaic_params(),
    )(*x_args, w_sc, b_sc, w_c1, b_c1, w_c2, b_c2)
    if L_pad != L:
        out = out[:, :, :L]
    return out


# ---------------------------------------------------------------------------
# Parameter init (deterministic, synthetic; weights pre-folded / pre-cast once)
# ---------------------------------------------------------------------------
def _conv_init(key, cout, cin, k):
    kw, kb = jax.random.split(key)
    scale = 1.0 / math.sqrt(cin * k)
    w = scale * jax.random.normal(kw, (cout, cin, k), jnp.float32)
    b = 0.01 * jax.random.normal(kb, (cout,), jnp.float32)
    return w, b


def _convT_init(key, cin, cout, k):
    kw, kb = jax.random.split(key)
    scale = 1.0 / math.sqrt(cin * k)
    w = scale * jax.random.normal(kw, (cin, cout, k), jnp.float32)
    b = 0.01 * jax.random.normal(kb, (cout,), jnp.float32)
    return w, b


def init_generator_params(key, input_size, ngf, n_residual_layers):
    params = {}
    mult = int(2 ** len(RATIOS))
    n_keys = 2 + len(RATIOS) * (1 + 3 * n_residual_layers)
    keys = iter(jax.random.split(key, n_keys))

    w, b = _conv_init(next(keys), mult * ngf, input_size, 7)
    params["conv_in"] = _fold_conv(w, b)

    for i, r in enumerate(RATIOS):
        w, b = _convT_init(next(keys), mult * ngf, mult * ngf // 2, 2 * r)
        params[f"up{i}"] = _fold_convT_polyphase(w, b, r, r // 2 + r % 2, r % 2)
        dim = mult * ngf // 2
        for j in range(n_residual_layers):
            w1, b1 = _conv_init(next(keys), dim, dim, 3)
            w2, b2 = _conv_init(next(keys), dim, dim, 1)
            ws, bs = _conv_init(next(keys), dim, dim, 1)
            params[f"res{i}_{j}"] = {"c1": _fold_conv(w1, b1),
                                     "c2": _fold_conv(w2, b2),
                                     "sc": _fold_conv(ws, bs)}
        mult //= 2

    # Final conv: Cout=1 padded to 8 channels for aligned stores (sliced later).
    w, b = _conv_init(next(keys), 1, ngf, 7)
    w8 = jnp.zeros((8, ngf, 7), jnp.float32).at[0].set(w[0])
    b8 = jnp.zeros((8,), jnp.float32).at[0].set(b[0])
    params["conv_out"] = _fold_conv(w8, b8)
    return params


# ---------------------------------------------------------------------------
# Generator forward (all conv / activation compute in Pallas kernels)
# ---------------------------------------------------------------------------
def generator_forward(params, x, n_residual_layers):
    h = x.astype(COMPUTE_DTYPE)

    # ReflectionPad1d(3) + Conv1d(k=7)
    w, b = params["conv_in"]
    hp = jnp.pad(h, ((0, 0), (0, 0), (3, 3)), mode="reflect")
    h = pallas_conv1d(hp, w, b, K=7, Lout=h.shape[-1])

    for i, r in enumerate(RATIOS):
        # LeakyReLU(0.2) + ConvTranspose1d(k=2r, s=r, p=r//2+r%2, op=r%2),
        # run as a polyphase dense conv (pre-LeakyReLU fused in the kernel).
        w, b = params[f"up{i}"]
        h = pallas_conv_transpose1d(h, w, b, stride=r, kernel_size=2 * r,
                                    padding=r // 2 + r % 2,
                                    output_padding=r % 2)
        for j in range(n_residual_layers):
            h = pallas_resnet_block(h, params[f"res{i}_{j}"], dilation=3 ** j)

    # LeakyReLU + ReflectionPad1d(3) + Conv1d(k=7, Cout padded 1->8) + Tanh
    w, b = params["conv_out"]
    hp = jnp.pad(h, ((0, 0), (0, 0), (3, 3)), mode="reflect")
    h = pallas_conv1d(hp, w, b, K=7, Lout=h.shape[-1],
                      pre_lrelu=True, post_tanh=True, out_dtype=jnp.float32)
    return h[:, :1, :]


# ---------------------------------------------------------------------------
if __name__ == "__main__":
    B, input_size, ngf, n_res, T0 = 2, 16, 16, 2, 8
    keys = jax.random.split(jax.random.PRNGKey(0), 20)
    f32 = jnp.float32
    bfr = lambda a: a.astype(jnp.bfloat16).astype(f32)      # bf16 rounding
    lrelu = lambda v: jnp.where(v >= 0, v, 0.2 * v)

    def ref_conv(x, w, b, dil=1):
        return lax.conv_general_dilated(
            x, w, window_strides=(1,), padding="VALID", rhs_dilation=(dil,),
            dimension_numbers=("NCH", "OIH", "NCH")) + b[None, :, None]

    # ---- check 1: tiled dilated conv (incl. pad-and-crop) vs. lax ----------
    Ci, Co, K, dil = 16, 32, 3, 2
    for Lo in (2048, 1100):            # 2048: tiled, exact; 1100: tiled + crop
        xt = jax.random.normal(keys[2], (B, Ci, Lo + (K - 1) * dil), f32)
        wt = 0.1 * jax.random.normal(keys[3], (Co, Ci, K), f32)
        bt = 0.1 * jax.random.normal(keys[4], (Co,), f32)
        wf, bf = _fold_conv(wt, bt)
        y_p = pallas_conv1d(xt, wf, bf, K=K, dilation=dil, Lout=Lo)
        y_r = ref_conv(bfr(xt), bfr(wt), bt, dil)
        assert y_p.shape == y_r.shape
        assert jnp.allclose(y_p.astype(f32), y_r, atol=3e-2, rtol=3e-2), \
            f"conv1d mismatch (Lout={Lo})"

    # ---- check 2: polyphase transposed conv vs. zero-upsample reference ----
    Ci, Co, r, L = 16, 16, 8, 24
    Kt, s, p = 2 * r, r, r // 2
    xt = jax.random.normal(keys[5], (B, Ci, L), f32)
    wt = (1.0 / math.sqrt(Ci * Kt)) * jax.random.normal(keys[6], (Ci, Co, Kt), f32)
    bt = 0.01 * jax.random.normal(keys[7], (Co,), f32)
    wf, bf = _fold_convT_polyphase(wt, bt, s, p, 0)
    y_p = pallas_conv_transpose1d(xt, wf, bf, stride=s, kernel_size=Kt,
                                  padding=p, output_padding=0)
    xa = lrelu(bfr(xt))                          # model applies LeakyReLU first
    x_up = jnp.zeros((B, Ci, (L - 1) * s + 1), f32).at[:, :, ::s].set(xa)
    PL = Kt - 1 - p
    x_up = jnp.pad(x_up, ((0, 0), (0, 0), (PL, PL)))
    w_cv = jnp.transpose(jnp.flip(bfr(wt), axis=2), (1, 0, 2))
    y_r = ref_conv(x_up, w_cv, bt)
    assert y_p.shape == y_r.shape
    assert jnp.allclose(y_p.astype(f32), y_r, atol=3e-2, rtol=3e-2), "convT mismatch"

    # ---- check 3: fused residual block (tiled, dilated) vs. lax -------------
    C, d, L = 16, 3, 2048
    xt = jax.random.normal(keys[8], (B, C, L), f32)
    w1 = (1.0 / math.sqrt(3 * C)) * jax.random.normal(keys[9], (C, C, 3), f32)
    w2 = (1.0 / math.sqrt(C)) * jax.random.normal(keys[10], (C, C, 1), f32)
    ws = (1.0 / math.sqrt(C)) * jax.random.normal(keys[11], (C, C, 1), f32)
    b1 = 0.01 * jax.random.normal(keys[12], (C,), f32)
    b2 = 0.01 * jax.random.normal(keys[13], (C,), f32)
    bs = 0.01 * jax.random.normal(keys[14], (C,), f32)
    blk = {"sc": _fold_conv(ws, bs), "c1": _fold_conv(w1, b1),
           "c2": _fold_conv(w2, b2)}
    y_p = pallas_resnet_block(xt, blk, dilation=d)
    xq = bfr(xt)
    y_r = ref_conv(xq, bfr(ws), bs)
    hb = jnp.pad(lrelu(xq), ((0, 0), (0, 0), (d, d)), mode="reflect")
    hb = lrelu(ref_conv(hb, bfr(w1), b1, d))
    y_r = y_r + ref_conv(hb, bfr(w2), b2)
    assert y_p.shape == y_r.shape
    assert jnp.allclose(y_p.astype(f32), y_r, atol=6e-2, rtol=6e-2), "resblock mismatch"

    # ---- full generator forward ---------------------------------------------
    params = init_generator_params(keys[0], input_size, ngf, n_res)
    x = jax.random.normal(keys[1], (B, input_size, T0), f32)
    gen = jax.jit(lambda pp, xx: generator_forward(pp, xx, n_res))
    y = jax.block_until_ready(gen(params, x))

    hop = 1
    for rr in RATIOS:
        hop *= rr
    assert y.shape == (B, 1, T0 * hop), y.shape
    assert y.dtype == jnp.float32
    assert bool(jnp.all(jnp.isfinite(y)))
    assert bool(jnp.all(jnp.abs(y) <= 1.0 + 1e-6))          # tanh output range
    print("KERNEL_OK")
</pallas_src>

<mosaic_0001>
module attributes {stable_mosaic.version = 11 : i64} {
  func.func @kernel(%arg0: i32, %arg1: i32, %arg2: memref<1x16x1024xbf16, #tpu.memory_space<vmem>>, %arg3: memref<1x16x1024xbf16, #tpu.memory_space<vmem>>, %arg4: memref<32x48xbf16, #tpu.memory_space<vmem>>, %arg5: memref<32x1xf32, #tpu.memory_space<vmem>>, %arg6: memref<1x32x1024xbf16, #tpu.memory_space<vmem>>, %arg7: memref<48x1024xbf16, #tpu.memory_space<vmem>>) attributes {dimension_semantics = [#tpu.dimension_semantics<parallel>, #tpu.dimension_semantics<parallel>], iteration_bounds = array<i64: 2, 2>, scalar_prefetch = 0 : i64, scratch_operands = 1 : i64, tpu.core_type = #tpu.core_type<tc>, window_params = [{transform_indices = @transform_0, window_bounds = array<i64: 1, 16, 1024>}, {transform_indices = @transform_1, window_bounds = array<i64: 1, 16, 1024>}, {pipeline_mode = #tpu.pipeline_mode<synchronous>, transform_indices = @transform_2, window_bounds = array<i64: 32, 48>}, {pipeline_mode = #tpu.pipeline_mode<synchronous>, transform_indices = @transform_3, window_bounds = array<i64: 32, 1>}, {transform_indices = @transform_4, window_bounds = array<i64: 1, 32, 1024>}]} {
    %c0 = arith.constant 0 : index
    %c0_0 = arith.constant 0 : index
    %c0_1 = arith.constant 0 : index
    %0 = vector.load %arg2[%c0, %c0_0, %c0_1] : memref<1x16x1024xbf16, #tpu.memory_space<vmem>>, vector<1x16x1024xbf16>
    %1 = vector.shape_cast %0 : vector<1x16x1024xbf16> to vector<16x1024xbf16>
    %c0_2 = arith.constant 0 : index
    %c0_3 = arith.constant 0 : index
    %2 = vector.load %arg7[%c0_2, %c0_3] : memref<48x1024xbf16, #tpu.memory_space<vmem>>, vector<16x1024xbf16>
    tpu.vector_store %arg7[%c0_2, %c0_3], %1 {strides = array<i32>} : memref<48x1024xbf16, #tpu.memory_space<vmem>>, vector<16x1024xbf16>,
    %c0_4 = arith.constant 0 : index
    %c0_5 = arith.constant 0 : index
    %c2 = arith.constant 2 : index
    %3 = vector.load %arg2[%c0_4, %c0_5, %c2] : memref<1x16x1024xbf16, #tpu.memory_space<vmem>>, vector<1x16x1022xbf16>
    %4 = vector.shape_cast %3 : vector<1x16x1022xbf16> to vector<16x1022xbf16>
    %c16 = arith.constant 16 : index
    %c0_6 = arith.constant 0 : index
    %5 = vector.load %arg7[%c16, %c0_6] : memref<48x1024xbf16, #tpu.memory_space<vmem>>, vector<16x1022xbf16>
    tpu.vector_store %arg7[%c16, %c0_6], %4 {strides = array<i32>} : memref<48x1024xbf16, #tpu.memory_space<vmem>>, vector<16x1022xbf16>,
    %c0_7 = arith.constant 0 : index
    %c0_8 = arith.constant 0 : index
    %c0_9 = arith.constant 0 : index
    %6 = vector.load %arg3[%c0_7, %c0_8, %c0_9] : memref<1x16x1024xbf16, #tpu.memory_space<vmem>>, vector<1x16x2xbf16>
    %7 = vector.shape_cast %6 : vector<1x16x2xbf16> to vector<16x2xbf16>
    %c16_10 = arith.constant 16 : index
    %c1022 = arith.constant 1022 : index
    %8 = vector.load %arg7[%c16_10, %c1022] : memref<48x1024xbf16, #tpu.memory_space<vmem>>, vector<16x2xbf16>
    tpu.vector_store %arg7[%c16_10, %c1022], %7 {strides = array<i32>} : memref<48x1024xbf16, #tpu.memory_space<vmem>>, vector<16x2xbf16>,
    %c0_11 = arith.constant 0 : index
    %c0_12 = arith.constant 0 : index
    %c4 = arith.constant 4 : index
    %9 = vector.load %arg2[%c0_11, %c0_12, %c4] : memref<1x16x1024xbf16, #tpu.memory_space<vmem>>, vector<1x16x1020xbf16>
    %10 = vector.shape_cast %9 : vector<1x16x1020xbf16> to vector<16x1020xbf16>
    %c32 = arith.constant 32 : index
    %c0_13 = arith.constant 0 : index
    %11 = vector.load %arg7[%c32, %c0_13] : memref<48x1024xbf16, #tpu.memory_space<vmem>>, vector<16x1020xbf16>
    tpu.vector_store %arg7[%c32, %c0_13], %10 {strides = array<i32>} : memref<48x1024xbf16, #tpu.memory_space<vmem>>, vector<16x1020xbf16>,
    %c0_14 = arith.constant 0 : index
    %c0_15 = arith.constant 0 : index
    %c0_16 = arith.constant 0 : index
    %12 = vector.load %arg3[%c0_14, %c0_15, %c0_16] : memref<1x16x1024xbf16, #tpu.memory_space<vmem>>, vector<1x16x4xbf16>
    %13 = vector.shape_cast %12 : vector<1x16x4xbf16> to vector<16x4xbf16>
    %c32_17 = arith.constant 32 : index
    %c1020 = arith.constant 1020 : index
    %14 = vector.load %arg7[%c32_17, %c1020] : memref<48x1024xbf16, #tpu.memory_space<vmem>>, vector<16x4xbf16>
    tpu.vector_store %arg7[%c32_17, %c1020], %13 {strides = array<i32>} : memref<48x1024xbf16, #tpu.memory_space<vmem>>, vector<16x4xbf16>,
    %c0_18 = arith.constant 0 : index
    %c0_19 = arith.constant 0 : index
    %15 = vector.load %arg4[%c0_18, %c0_19] : memref<32x48xbf16, #tpu.memory_space<vmem>>, vector<32x48xbf16>
    %c0_20 = arith.constant 0 : index
    %c0_21 = arith.constant 0 : index
    %16 = vector.load %arg7[%c0_20, %c0_21] : memref<48x1024xbf16, #tpu.memory_space<vmem>>, vector<48x1024xbf16>
    %cst = arith.constant dense<0.000000e+00> : vector<32x1024xf32>
    %17 = tpu.matmul %15, %16, %cst {dimension_numbers = #tpu.dot_dimension_numbers<[1], [0], [0], [1], [0, 0, 1, 1], [], []>} : vector<32x48xbf16>, vector<48x1024xbf16>, vector<32x1024xf32> -> vector<32x1024xf32>
    %c0_22 = arith.constant 0 : index
    %c0_23 = arith.constant 0 : index
    %18 = vector.load %arg5[%c0_22, %c0_23] : memref<32x1xf32, #tpu.memory_space<vmem>>, vector<32x1xf32>
    %19 = vector.broadcast %18 : vector<32x1xf32> to vector<32x1024xf32>
    %20 = arith.addf %17, %19 : vector<32x1024xf32>
    %21 = arith.truncf %20 : vector<32x1024xf32> to vector<32x1024xbf16>
    %c0_24 = arith.constant 0 : index
    %c0_25 = arith.constant 0 : index
    %c0_26 = arith.constant 0 : index
    %22 = vector.load %arg6[%c0_24, %c0_25, %c0_26] : memref<1x32x1024xbf16, #tpu.memory_space<vmem>>, vector<1x32x1024xbf16>
    %23 = vector.shape_cast %22 : vector<1x32x1024xbf16> to vector<32x1024xbf16>
    %24 = vector.shape_cast %21 : vector<32x1024xbf16> to vector<1x32x1024xbf16>
    tpu.vector_store %arg6[%c0_24, %c0_25, %c0_26], %24 {strides = array<i32>} : memref<1x32x1024xbf16, #tpu.memory_space<vmem>>, vector<1x32x1024xbf16>,
    return
  }
  func.func @transform_0(%arg0: i32, %arg1: i32) -> (i32, i32, i32) {
    %c0_i32 = arith.constant 0 : i32
    %c0_i32_0 = arith.constant 0 : i32
    return %arg0, %c0_i32, %arg1 : i32, i32, i32
  }
  func.func @transform_1(%arg0: i32, %arg1: i32) -> (i32, i32, i32) {
    %c1_i32 = arith.constant 1 : i32
    %0 = arith.addi %arg1, %c1_i32 : i32
    %c0_i32 = arith.constant 0 : i32
    %c0_i32_0 = arith.constant 0 : i32
    return %arg0, %c0_i32, %0 : i32, i32, i32
  }
  func.func @transform_2(%arg0: i32, %arg1: i32) -> (i32, i32) {
    %c0_i32 = arith.constant 0 : i32
    %c0_i32_0 = arith.constant 0 : i32
    %c0_i32_1 = arith.constant 0 : i32
    return %c0_i32, %c0_i32_0 : i32, i32
  }
  func.func @transform_3(%arg0: i32, %arg1: i32) -> (i32, i32) {
    %c0_i32 = arith.constant 0 : i32
    %c0_i32_0 = arith.constant 0 : i32
    %c0_i32_1 = arith.constant 0 : i32
    return %c0_i32, %c0_i32_0 : i32, i32
  }
  func.func @transform_4(%arg0: i32, %arg1: i32) -> (i32, i32, i32) {
    %c0_i32 = arith.constant 0 : i32
    %c0_i32_0 = arith.constant 0 : i32
    return %arg0, %c0_i32, %arg1 : i32, i32, i32
  }
}

</mosaic_0001>

<llo_original>
// kernel: tpu_custom_call.1
$region0: #{tpu_custom_call.1}
  #allocation0 [shape = 'u32[]', space=smem, size = 0x4, offset = 0x4, fixed_abs, tag = 'smem constant byte address 0x4 - core index']
  #allocation1 [shape = 'u32[144,128]{1,0:T(1,128)}', space=vmem, size = 0x12000, scoped, tag = 'internal scratch']
  #allocation2 [shape = 'bf16[48,1024]{1,0:T(16,128)(2,1)}', space=vmem, size = 0x18000, scoped, tag = 'scratch operand']
  %s0 = inlined_call_operand.hbm [shape: bf16[2,16,3072], index: 0, kind: input, shape index: {}]
  %s1 = inlined_call_operand.hbm [shape: bf16[2,16,3072], index: 1, kind: input, shape index: {}]
  %s2 = inlined_call_operand.vmem [shape: bf16[32,48], index: 2, kind: input, shape index: {}]
  %s3 = inlined_call_operand.vmem [shape: f32[32,1], index: 3, kind: input, shape index: {}]
  %s4 = inlined_call_operand.hbm [shape: bf16[2,32,2048], index: 4, kind: output, shape index: {}]
  %s5 = sld [smem:[#allocation0]]
  $region57: #{tpu_custom_call.1} parent=0
    _
  %s7 = ssub.s32 1, %s5
  %s8 = scalar_select 0, %s7, %s5
  $region1: #{tpu_custom_call.1} parent=0
    #allocation3 [shape = 'u8[65536]{0}', space=vmem, size = 0x10000, scoped, tag = 'input window, operand 0']
    #allocation4 [shape = 's32[2]{0}', space=sflag, size = 0x8, scoped, tag = 'scoped memory for tpu_custom_call.1']
    #allocation5 [shape = 's32[2]{0}', space=sflag, size = 0x8, scoped, tag = 'scoped memory for tpu_custom_call.1']
    #allocation6 [shape = 'u8[65536]{0}', space=vmem, size = 0x10000, scoped, tag = 'input window, operand 1']
    #allocation7 [shape = 's32[2]{0}', space=sflag, size = 0x8, scoped, tag = 'scoped memory for tpu_custom_call.1']
    #allocation8 [shape = 'u8[131072]{0}', space=vmem, size = 0x20000, scoped, tag = 'output window, operand 0']
    %9 = vsyncpa [#allocation4], 0
    %s10 = scalar_lea.sflag [#allocation4], 1
    %11 = vsyncpa %s10, 0
    %12 = vsyncpa [#allocation7], 0
    %s13 = scalar_lea.sflag [#allocation7], 1
    %14 = vsyncpa %s13, 0
    %15 = vsyncpa [#allocation5], 0
    %s16 = scalar_lea.sflag [#allocation5], 1
    %17 = vsyncpa %s16, 0
    loop: start=0, step=1, limit=6
    $region2: #{tpu_custom_call.1} parent=1 // loop_pre_header
      _
    $region3: #{tpu_custom_call.1} parent=1 // loop_header
      %s19 = sphi 0, %s23
      %p20 = scmp.ge.s32.totalorder %s19, 6
      %s26 = sphi 0, %s38
      %s27 = sphi 0, %s34
      %s28 = sphi 0, %s26
      %s29 = sphi 0, %s27
      %s30 = sphi 0, %s28
      %s31 = sphi 0, %s29
      %s43 = sphi 0, %s45
      %s46 = sphi 0, %s43
      %s47 = sphi 0, %s46
      %s63 = sphi 0, %s47
      %s73 = sphi 0, %s75
      %s76 = sphi 0, %s73
      %s77 = sphi 0, %s76
      %s93 = sphi 0, %s77
      %s97 = sphi 0, %s97
      %s99 = sphi 0, %s97
      %s100 = sphi 0, %s99
      %s114 = sphi 0, %s100
      %s118 = sphi 0, %s118
      %s120 = sphi 0, %s118
      %s121 = sphi 0, %s120
      %s135 = sphi 0, %s121
      %s143 = sphi 0, %s145
      %s146 = sphi 0, %s143
      %s147 = sphi 0, %s146
      %s163 = sphi 0, %s147
    $region4: #{tpu_custom_call.1} parent=1 // loop_header_branch
      %22 = sbr.rel (%p20) target = $region8
    $region5: #{tpu_custom_call.1} parent=1 // loop_body
      %s24 = ssub.s32 %s19, 1
      %s25 = ssub.s32 %s19, 2
      %s32 = sadd.s32 1, %s27
      %p33 = scmp.ge.s32.totalorder %s32, 2
      %s34 = scalar_select %p33, 0, %s32
      %s35 = sadd.s32 1, %s26
      %s36 = scalar_select %p33, %s35, %s26
      %p37 = scmp.ge.s32.totalorder %s36, 2
      %s38 = scalar_select %p37, 0, %s36
      %s39 = ssub.s32 %s26, %s38
      %s40 = ssub.s32 %s27, %s34
      %s41 = sor.u32 %s39, %s40
      %p42 = scmp.eq.s32.totalorder %s41, 0
      %s44 = sadd.s32 %s43, 1
      %s45 = scalar_select %p42, %s43, %s44
      %p48 = pneg %p42
      %p49 = scmp.eq.s32.totalorder %s19, 3
      %p50 = por %p48, %p49
      %p51 = scmp.ne.s32.totalorder %s43, %s46
      %p52 = scmp.eq.s32.totalorder %s19, 0
      %p53 = por %p51, %p52
      %p54 = scmp.ne.s32.totalorder %s43, %s46
      %p55 = scmp.eq.s32.totalorder %s24, 3
      %p56 = por %p54, %p55
      %p57 = scmp.ne.s32.totalorder %s46, %s47
      %p58 = scmp.eq.s32.totalorder %s24, 0
      %p59 = por %p57, %p58
      %p60 = scmp.ne.s32.totalorder %s46, %s47
      %p61 = scmp.eq.s32.totalorder %s25, 3
      %p62 = por %p60, %p61
      %p64 = scmp.ne.s32.totalorder %s47, %s63
      %p65 = scmp.eq.s32.totalorder %s25, 0
      %p66 = por %p64, %p65
      %s67 = sadd.s32 %s27, 1
      %s68 = sadd.s32 %s34, 1
      %s69 = ssub.s32 %s26, %s38
      %s70 = ssub.s32 %s67, %s68
      %s71 = sor.u32 %s69, %s70
      %p72 = scmp.eq.s32.totalorder %s71, 0
      %s74 = sadd.s32 %s73, 1
      %s75 = scalar_select %p72, %s73, %s74
      %p78 = pneg %p72
      %p79 = scmp.eq.s32.totalorder %s19, 3
      %p80 = por %p78, %p79
      %p81 = scmp.ne.s32.totalorder %s73, %s76
      %p82 = scmp.eq.s32.totalorder %s19, 0
      %p83 = por %p81, %p82
      %p84 = scmp.ne.s32.totalorder %s73, %s76
      %p85 = scmp.eq.s32.totalorder %s24, 3
      %p86 = por %p84, %p85
      %p87 = scmp.ne.s32.totalorder %s76, %s77
      %p88 = scmp.eq.s32.totalorder %s24, 0
      %p89 = por %p87, %p88
      %p90 = scmp.ne.s32.totalorder %s76, %s77
      %p91 = scmp.eq.s32.totalorder %s25, 3
      %p92 = por %p90, %p91
      %p94 = scmp.ne.s32.totalorder %s77, %s93
      %p95 = scmp.eq.s32.totalorder %s25, 0
      %p96 = por %p94, %p95
      %s98 = sadd.s32 %s97, 1
      %p101 = scmp.eq.s32.totalorder %s19, 3
      %p102 = scmp.ne.s32.totalorder %s97, %s99
      %p103 = scmp.eq.s32.totalorder %s19, 0
      %p104 = por %p102, %p103
      %p105 = scmp.ne.s32.totalorder %s97, %s99
      %p106 = scmp.eq.s32.totalorder %s24, 3
      %p107 = por %p105, %p106
      %p108 = scmp.ne.s32.totalorder %s99, %s100
      %p109 = scmp.eq.s32.totalorder %s24, 0
      %p110 = por %p108, %p109
      %p111 = scmp.ne.s32.totalorder %s99, %s100
      %p112 = scmp.eq.s32.totalorder %s25, 3
      %p113 = por %p111, %p112
      %p115 = scmp.ne.s32.totalorder %s100, %s114
      %p116 = scmp.eq.s32.totalorder %s25, 0
      %p117 = por %p115, %p116
      %s119 = sadd.s32 %s118, 1
      %p122 = scmp.eq.s32.totalorder %s19, 3
      %p123 = scmp.ne.s32.totalorder %s118, %s120
      %p124 = scmp.eq.s32.totalorder %s19, 0
      %p125 = por %p123, %p124
      %p126 = scmp.ne.s32.totalorder %s118, %s120
      %p127 = scmp.eq.s32.totalorder %s24, 3
      %p128 = por %p126, %p127
      %p129 = scmp.ne.s32.totalorder %s120, %s121
      %p130 = scmp.eq.s32.totalorder %s24, 0
      %p131 = por %p129, %p130
      %p132 = scmp.ne.s32.totalorder %s120, %s121
      %p133 = scmp.eq.s32.totalorder %s25, 3
      %p134 = por %p132, %p133
      %p136 = scmp.ne.s32.totalorder %s121, %s135
      %p137 = scmp.eq.s32.totalorder %s25, 0
      %p138 = por %p136, %p137
      %s139 = ssub.s32 %s26, %s38
      %s140 = ssub.s32 %s27, %s34
      %s141 = sor.u32 %s139, %s140
      %p142 = scmp.eq.s32.totalorder %s141, 0
      %s144 = sadd.s32 %s143, 1
      %s145 = scalar_select %p142, %s143, %s144
      %p148 = pneg %p142
      %p149 = scmp.eq.s32.totalorder %s19, 3
      %p150 = por %p148, %p149
      %p151 = scmp.ne.s32.totalorder %s143, %s146
      %p152 = scmp.eq.s32.totalorder %s19, 0
      %p153 = por %p151, %p152
      %p154 = scmp.ne.s32.totalorder %s143, %s146
      %p155 = scmp.eq.s32.totalorder %s24, 3
      %p156 = por %p154, %p155
      %p157 = scmp.ne.s32.totalorder %s146, %s147
      %p158 = scmp.eq.s32.totalorder %s24, 0
      %p159 = por %p157, %p158
      %p160 = scmp.ne.s32.totalorder %s146, %s147
      %p161 = scmp.eq.s32.totalorder %s25, 3
      %p162 = por %p160, %p161
      %p164 = scmp.ne.s32.totalorder %s147, %s163
      %p165 = scmp.eq.s32.totalorder %s25, 0
      %p166 = por %p164, %p165
      %p167 = scmp.le.s32.totalorder 1, %s19
      %p168 = scmp.lt.s32.totalorder %s19, 5
      %p169 = pnand %p167, %p168
      %p170 = pneg %p169
      // Predicated region
      $region9: #{tpu_custom_call.1} parent=5 // pred_check
        _
      $region10: #{tpu_custom_call.1} parent=5 // pred_check_branch
        %172 = sbr.rel (%p169) target = $region12
      $region11: #{tpu_custom_call.1} parent=5 // pred_region
        %s173 = ssub.s32 %s19, 1
        // Predicated region
        $region13: #{tpu_custom_call.1} parent=11 // pred_check
          %p174 = pneg %p110
        $region14: #{tpu_custom_call.1} parent=11 // pred_check_branch
          %176 = sbr.rel (%p174) target = $region16
        $region15: #{tpu_custom_call.1} parent=11 // pred_region
          _
        $region16: #{tpu_custom_call.1} parent=11 // pred_fallthru
          _
        // Predicated region
        $region17: #{tpu_custom_call.1} parent=11 // pred_check
          %p177 = pneg %p131
        $region18: #{tpu_custom_call.1} parent=11 // pred_check_branch
          %179 = sbr.rel (%p177) target = $region20
        $region19: #{tpu_custom_call.1} parent=11 // pred_region
          _
        $region20: #{tpu_custom_call.1} parent=11 // pred_fallthru
          _
      $region12: #{tpu_custom_call.1} parent=5 // pred_fallthru
        _
      %p180 = scmp.lt.s32.totalorder %s19, 4
      // Predicated region
      $region21: #{tpu_custom_call.1} parent=5 // pred_check
        %p181 = pneg %p180
      $region22: #{tpu_custom_call.1} parent=5 // pred_check_branch
        %183 = sbr.rel (%p181) target = $region24
      $region23: #{tpu_custom_call.1} parent=5 // pred_region
        // Predicated region
        $region25: #{tpu_custom_call.1} parent=23 // pred_check
          %p184 = pneg %p53
        $region26: #{tpu_custom_call.1} parent=23 // pred_check_branch
          %186 = sbr.rel (%p184) target = $region28
        $region27: #{tpu_custom_call.1} parent=23 // pred_region
          %s187 = sand.u32 %s43, 1
          %s188 = scalar_lea.sflag [#allocation4], %s187
          %s189 = sand.u32 %s43, 1
          %s190 = smul.addr %s189, 64
          %s191 = scalar_lea.vmem [#allocation3], %s190
          %s192 = smul.u32 8, %s27
          %s194 = ssub.s32 1024, 1024
          %195 = vsyncadd %s188, %s194
          %s196 = smul.addr %s26, 48
          %s197 = sadd.s32 %s192, %s196
          %s198 = smul.addr %s197, 64
          %s199 = scalar_lea.hbm %s0, %s198
          %s200 = sshll.u32 %s191, 4
          %s201 = int_to_ptr.vmem [resolvable:$true] %s200
          %206 = dma.hbm_to_vmem [thread:$0]  %s199, 1024, %s201, %s188, 1536, 512, 32
        $region28: #{tpu_custom_call.1} parent=23 // pred_fallthru
          _
        // Predicated region
        $region29: #{tpu_custom_call.1} parent=23 // pred_check
          %p207 = pneg %p83
        $region30: #{tpu_custom_call.1} parent=23 // pred_check_branch
          %209 = sbr.rel (%p207) target = $region32
        $region31: #{tpu_custom_call.1} parent=23 // pred_region
          %s210 = sand.u32 %s73, 1
          %s211 = scalar_lea.sflag [#allocation7], %s210
          %s212 = sand.u32 %s73, 1
          %s213 = smul.addr %s212, 64
          %s214 = scalar_lea.vmem [#allocation6], %s213
          %s215 = sadd.s32 %s27, 1
          %s216 = smul.u32 8, %s215
          %s218 = ssub.s32 1024, 1024
          %219 = vsyncadd %s211, %s218
          %s220 = smul.addr %s26, 48
          %s221 = sadd.s32 %s216, %s220
          %s222 = smul.addr %s221, 64
          %s223 = scalar_lea.hbm %s1, %s222
          %s224 = sshll.u32 %s214, 4
          %s225 = int_to_ptr.vmem [resolvable:$true] %s224
          %230 = dma.hbm_to_vmem [thread:$0]  %s223, 1024, %s225, %s211, 1536, 512, 32
        $region32: #{tpu_custom_call.1} parent=23 // pred_fallthru
          _
      $region24: #{tpu_custom_call.1} parent=5 // pred_fallthru
        _
      %p231 = scmp.le.s32.totalorder 1, %s19
      %p232 = scmp.lt.s32.totalorder %s19, 5
      %p233 = pnand %p231, %p232
      %p234 = pneg %p233
      // Predicated region
      $region33: #{tpu_custom_call.1} parent=5 // pred_check
        _
      $region34: #{tpu_custom_call.1} parent=5 // pred_check_branch
        %236 = sbr.rel (%p233) target = $region36
      $region35: #{tpu_custom_call.1} parent=5 // pred_region
        %s237 = ssub.s32 %s19, 1
        %s238 = sand.u32 %s46, 1
        %s239 = scalar_lea.sflag [#allocation4], %s238
        %s240 = sand.u32 %s46, 1
        %s241 = smul.addr %s240, 64
        %s242 = scalar_lea.vmem [#allocation3], %s241
        // Predicated region
        $region37: #{tpu_custom_call.1} parent=35 // pred_check
          %p243 = pneg %p59
        $region38: #{tpu_custom_call.1} parent=35 // pred_check_branch
          %245 = sbr.rel (%p243) target = $region40
        $region39: #{tpu_custom_call.1} parent=35 // pred_region
          %246 = dma.done %s239, 1024
        $region40: #{tpu_custom_call.1} parent=35 // pred_fallthru
          _
        %s247 = sand.u32 %s76, 1
        %s248 = scalar_lea.sflag [#allocation7], %s247
        %s249 = sand.u32 %s76, 1
        %s250 = smul.addr %s249, 64
        %s251 = scalar_lea.vmem [#allocation6], %s250
        // Predicated region
        $region41: #{tpu_custom_call.1} parent=35 // pred_check
          %p252 = pneg %p89
        $region42: #{tpu_custom_call.1} parent=35 // pred_check_branch
          %254 = sbr.rel (%p252) target = $region44
        $region43: #{tpu_custom_call.1} parent=35 // pred_region
          %255 = dma.done %s248, 1024
        $region44: #{tpu_custom_call.1} parent=35 // pred_fallthru
          _
        %s256 = sand.u32 %s46, 1
        %s257 = scalar_lea.sflag [#allocation4], %s256
        %s258 = sand.u32 %s46, 1
        %s259 = smul.addr %s258, 64
        %s260 = scalar_lea.vmem [#allocation3], %s259
        %p261 = pneg %p59
        %p262 = pneg %p56
        %s263 = sand.u32 %s76, 1
        %s264 = scalar_lea.sflag [#allocation7], %s263
        %s265 = sand.u32 %s76, 1
        %s266 = smul.addr %s265, 64
        %s267 = scalar_lea.vmem [#allocation6], %s266
        %p268 = pneg %p89
        %p269 = pneg %p86
        %p270 = pneg %p110
        %p271 = pneg %p107
        %p272 = pneg %p131
        %p273 = pneg %p128
        %p274 = pneg %p159
        %p275 = pneg %p156
        %s276 = sand.u32 %s146, 1
        %s277 = scalar_lea.sflag [#allocation5], %s276
        %s278 = sand.u32 %s146, 1
        %s279 = smul.addr %s278, 128
        %s280 = scalar_lea.vmem [#allocation8], %s279
        %s281 = smul.u32 8, %s29
        %s282 = sadd.s32 %s29, 1
        %s283 = smul.u32 8, %s282
        %s284 = smul.u32 8, %s29
        %v286 = vld [vmem:[%s242] sm:$0xff]
        %v287 = vld [vmem:[%s242 + $0x8] sm:$0xff]
        %v288 = vld [vmem:[%s242 + $0x10] sm:$0xff]
        %v289 = vld [vmem:[%s242 + $0x18] sm:$0xff]
        %v290 = vld [vmem:[%s242 + $0x20] sm:$0xff]
        %v291 = vld [vmem:[%s242 + $0x28] sm:$0xff]
        %v292 = vld [vmem:[%s242 + $0x30] sm:$0xff]
        %v293 = vld [vmem:[%s242 + $0x38] sm:$0xff]
        %v302 = vunpack.c.l.b16 %v286
        %v303 = vunpack.c.h.b16 %v286
        %v304 = vunpack.c.l.b16 %v287
        %v305 = vunpack.c.h.b16 %v287
        %v306 = vunpack.c.l.b16 %v288
        %v307 = vunpack.c.h.b16 %v288
        %v308 = vunpack.c.l.b16 %v289
        %v309 = vunpack.c.h.b16 %v289
        %v310 = vunpack.c.l.b16 %v290
        %v311 = vunpack.c.h.b16 %v290
        %v312 = vunpack.c.l.b16 %v291
        %v313 = vunpack.c.h.b16 %v291
        %v314 = vunpack.c.l.b16 %v292
        %v315 = vunpack.c.h.b16 %v292
        %v316 = vunpack.c.l.b16 %v293
        %v317 = vunpack.c.h.b16 %v293
        %v318 = vpack.c.b16 %v310, %v302
        %v319 = vpack.c.b16 %v311, %v303
        %v320 = vpack.c.b16 %v312, %v304
        %v321 = vpack.c.b16 %v313, %v305
        %v322 = vpack.c.b16 %v314, %v306
        %v323 = vpack.c.b16 %v315, %v307
        %v324 = vpack.c.b16 %v316, %v308
        %v325 = vpack.c.b16 %v317, %v309
        %334 = vst [vmem:[#allocation2] sm:$0xff] %v318
        %335 = vst [vmem:[#allocation2 + $0x8] sm:$0xff] %v319
        %336 = vst [vmem:[#allocation2 + $0x10] sm:$0xff] %v320
        %337 = vst [vmem:[#allocation2 + $0x18] sm:$0xff] %v321
        %338 = vst [vmem:[#allocation2 + $0x20] sm:$0xff] %v322
        %339 = vst [vmem:[#allocation2 + $0x28] sm:$0xff] %v323
        %340 = vst [vmem:[#allocation2 + $0x30] sm:$0xff] %v324
        %341 = vst [vmem:[#allocation2 + $0x38] sm:$0xff] %v325
        %v342 = vld [vmem:[%s242] sm:$0xff]
        %v343 = vld [vmem:[%s242 + $0x8] sm:$0xff]
        %v344 = vld [vmem:[%s242 + $0x10] sm:$0xff]
        %v345 = vld [vmem:[%s242 + $0x18] sm:$0xff]
        %v346 = vld [vmem:[%s242 + $0x20] sm:$0xff]
        %v347 = vld [vmem:[%s242 + $0x28] sm:$0xff]
        %v348 = vld [vmem:[%s242 + $0x30] sm:$0xff]
        %v349 = vld [vmem:[%s242 + $0x38] sm:$0xff]
        %v358 = vunpack.c.l.b16 %v342
        %v359 = vunpack.c.h.b16 %v342
        %v360 = vunpack.c.l.b16 %v343
        %v361 = vunpack.c.h.b16 %v343
        %v362 = vunpack.c.l.b16 %v344
        %v363 = vunpack.c.h.b16 %v344
        %v364 = vunpack.c.l.b16 %v345
        %v365 = vunpack.c.h.b16 %v345
        %v366 = vunpack.c.l.b16 %v346
        %v367 = vunpack.c.h.b16 %v346
        %v368 = vunpack.c.l.b16 %v347
        %v369 = vunpack.c.h.b16 %v347
        %v370 = vunpack.c.l.b16 %v348
        %v371 = vunpack.c.h.b16 %v348
        %v372 = vunpack.c.l.b16 %v349
        %v373 = vunpack.c.h.b16 %v349
        %v374 = vpack.c.b16 %v366, %v358
        %v375 = vpack.c.b16 %v367, %v359
        %v376 = vpack.c.b16 %v368, %v360
        %v377 = vpack.c.b16 %v369, %v361
        %v378 = vpack.c.b16 %v370, %v362
        %v379 = vpack.c.b16 %v371, %v363
        %v380 = vpack.c.b16 %v372, %v364
        %v381 = vpack.c.b16 %v373, %v365
        %382 = vrot.lane.b32.xlu0 %v374, 126
        %v383 = vpop.permute.xlu0 %382
        %384 = vrot.lane.b32.xlu0 %v375, 126
        %v385 = vpop.permute.xlu0 %384
        %386 = vrot.lane.b32.xlu0 %v376, 126
        %v387 = vpop.permute.xlu0 %386
        %388 = vrot.lane.b32.xlu0 %v377, 126
        %v389 = vpop.permute.xlu0 %388
        %390 = vrot.lane.b32.xlu0 %v378, 126
        %v391 = vpop.permute.xlu0 %390
        %392 = vrot.lane.b32.xlu0 %v379, 126
        %v393 = vpop.permute.xlu0 %392
        %394 = vrot.lane.b32.xlu0 %v380, 126
        %v395 = vpop.permute.xlu0 %394
        %396 = vrot.lane.b32.xlu0 %v381, 126
        %v397 = vpop.permute.xlu0 %396
        %vm398 = vcmask 1031168
        %v399 = vsel %vm398, %v383, %v385
        %v400 = vsel %vm398, %v385, %v387
        %v401 = vsel %vm398, %v387, %v389
        %v402 = vsel %vm398, %v389, %v391
        %v403 = vsel %vm398, %v391, %v393
        %v404 = vsel %vm398, %v393, %v395
        %v405 = vsel %vm398, %v395, %v397
        %414 = vst [vmem:[#allocation2 + $0x40] sm:$0xff] %v399
        %415 = vst [vmem:[#allocation2 + $0x48] sm:$0xff] %v400
        %416 = vst [vmem:[#allocation2 + $0x50] sm:$0xff] %v401
        %417 = vst [vmem:[#allocation2 + $0x58] sm:$0xff] %v402
        %418 = vst [vmem:[#allocation2 + $0x60] sm:$0xff] %v403
        %419 = vst [vmem:[#allocation2 + $0x68] sm:$0xff] %v404
        %420 = vst [vmem:[#allocation2 + $0x70] sm:$0xff] %v405
        %vm421 = vcmask 1031168
        %422 = vst.msk [vmem:[#allocation2 + $0x78] sm:$0xff] %vm421, %v397
        %v423 = vld [vmem:[%s251] sm:$0xf]
        %v424 = vld [vmem:[%s251 + $0x20] sm:$0xf]
        %v427 = vunpack.c.l.b16 %v423
        %v428 = vunpack.c.l.b16 %v424
        %v429 = vpack.c.b16 %v428, %v427
        %430 = vrot.lane.b32.xlu0 %v429, 126
        %v431 = vpop.permute.xlu0 %430
        %vm433 = vcmask 1048560
        %434 = vst.msk [vmem:[#allocation2 + $0x78] sm:$0xff] %vm433, %v431
        %v435 = vld [vmem:[%s242] sm:$0xff]
        %v436 = vld [vmem:[%s242 + $0x8] sm:$0xff]
        %v437 = vld [vmem:[%s242 + $0x10] sm:$0xff]
        %v438 = vld [vmem:[%s242 + $0x18] sm:$0xff]
        %v439 = vld [vmem:[%s242 + $0x20] sm:$0xff]
        %v440 = vld [vmem:[%s242 + $0x28] sm:$0xff]
        %v441 = vld [vmem:[%s242 + $0x30] sm:$0xff]
        %v442 = vld [vmem:[%s242 + $0x38] sm:$0xff]
        %v451 = vunpack.c.l.b16 %v435
        %v452 = vunpack.c.h.b16 %v435
        %v453 = vunpack.c.l.b16 %v436
        %v454 = vunpack.c.h.b16 %v436
        %v455 = vunpack.c.l.b16 %v437
        %v456 = vunpack.c.h.b16 %v437
        %v457 = vunpack.c.l.b16 %v438
        %v458 = vunpack.c.h.b16 %v438
        %v459 = vunpack.c.l.b16 %v439
        %v460 = vunpack.c.h.b16 %v439
        %v461 = vunpack.c.l.b16 %v440
        %v462 = vunpack.c.h.b16 %v440
        %v463 = vunpack.c.l.b16 %v441
        %v464 = vunpack.c.h.b16 %v441
        %v465 = vunpack.c.l.b16 %v442
        %v466 = vunpack.c.h.b16 %v442
        %v467 = vpack.c.b16 %v459, %v451
        %v468 = vpack.c.b16 %v460, %v452
        %v469 = vpack.c.b16 %v461, %v453
        %v470 = vpack.c.b16 %v462, %v454
        %v471 = vpack.c.b16 %v463, %v455
        %v472 = vpack.c.b16 %v464, %v456
        %v473 = vpack.c.b16 %v465, %v457
        %v474 = vpack.c.b16 %v466, %v458
        %475 = vrot.lane.b32.xlu0 %v467, 124
        %v476 = vpop.permute.xlu0 %475
        %477 = vrot.lane.b32.xlu0 %v468, 124
        %v478 = vpop.permute.xlu0 %477
        %479 = vrot.lane.b32.xlu0 %v469, 124
        %v480 = vpop.permute.xlu0 %479
        %481 = vrot.lane.b32.xlu0 %v470, 124
        %v482 = vpop.permute.xlu0 %481
        %483 = vrot.lane.b32.xlu0 %v471, 124
        %v484 = vpop.permute.xlu0 %483
        %485 = vrot.lane.b32.xlu0 %v472, 124
        %v486 = vpop.permute.xlu0 %485
        %487 = vrot.lane.b32.xlu0 %v473, 124
        %v488 = vpop.permute.xlu0 %487
        %489 = vrot.lane.b32.xlu0 %v474, 124
        %v490 = vpop.permute.xlu0 %489
        %vm491 = vcmask 1014784
        %v492 = vsel %vm491, %v476, %v478
        %v493 = vsel %vm491, %v478, %v480
        %v494 = vsel %vm491, %v480, %v482
        %v495 = vsel %vm491, %v482, %v484
        %v496 = vsel %vm491, %v484, %v486
        %v497 = vsel %vm491, %v486, %v488
        %v498 = vsel %vm491, %v488, %v490
        %507 = vst [vmem:[#allocation2 + $0x80] sm:$0xff] %v492
        %508 = vst [vmem:[#allocation2 + $0x88] sm:$0xff] %v493
        %509 = vst [vmem:[#allocation2 + $0x90] sm:$0xff] %v494
        %510 = vst [vmem:[#allocation2 + $0x98] sm:$0xff] %v495
        %511 = vst [vmem:[#allocation2 + $0xa0] sm:$0xff] %v496
        %512 = vst [vmem:[#allocation2 + $0xa8] sm:$0xff] %v497
        %513 = vst [vmem:[#allocation2 + $0xb0] sm:$0xff] %v498
        %vm514 = vcmask 1014784
        %515 = vst.msk [vmem:[#allocation2 + $0xb8] sm:$0xff] %vm514, %v490
        %v516 = vld [vmem:[%s251] sm:$0xf]
        %v517 = vld [vmem:[%s251 + $0x20] sm:$0xf]
        %v520 = vunpack.c.l.b16 %v516
        %v521 = vunpack.c.l.b16 %v517
        %v522 = vpack.c.b16 %v521, %v520
        %523 = vrot.lane.b32.xlu0 %v522, 124
        %v524 = vpop.permute.xlu0 %523
        %vm526 = vcmask 1048544
        %527 = vst.msk [vmem:[#allocation2 + $0xb8] sm:$0xff] %vm526, %v524
        %v528 = vld [vmem:[%s2] sm:$0xf]
        %v529 = vld [vmem:[%s2 + $0x4] sm:$0xf]
        %v530 = vld [vmem:[%s2 + $0x8] sm:$0xf]
        %v531 = vld [vmem:[%s2 + $0xc] sm:$0xf]
        %v532 = vld [vmem:[#allocation2] sm:$0xff]
        %v533 = vld [vmem:[#allocation2 + $0x8] sm:$0xff]
        %v534 = vld [vmem:[#allocation2 + $0x10] sm:$0xff]
        %v535 = vld [vmem:[#allocation2 + $0x18] sm:$0xff]
        %v536 = vld [vmem:[#allocation2 + $0x20] sm:$0xff]
        %v537 = vld [vmem:[#allocation2 + $0x28] sm:$0xff]
        %v538 = vld [vmem:[#allocation2 + $0x30] sm:$0xff]
        %v539 = vld [vmem:[#allocation2 + $0x38] sm:$0xff]
        %v540 = vld [vmem:[#allocation2 + $0x40] sm:$0xff]
        %v541 = vld [vmem:[#allocation2 + $0x48] sm:$0xff]
        %v542 = vld [vmem:[#allocation2 + $0x50] sm:$0xff]
        %v543 = vld [vmem:[#allocation2 + $0x58] sm:$0xff]
        %v544 = vld [vmem:[#allocation2 + $0x60] sm:$0xff]
        %v545 = vld [vmem:[#allocation2 + $0x68] sm:$0xff]
        %v546 = vld [vmem:[#allocation2 + $0x70] sm:$0xff]
        %v547 = vld [vmem:[#allocation2 + $0x78] sm:$0xff]
        %v548 = vld [vmem:[#allocation2 + $0x80] sm:$0xff]
        %v549 = vld [vmem:[#allocation2 + $0x88] sm:$0xff]
        %v550 = vld [vmem:[#allocation2 + $0x90] sm:$0xff]
        %v551 = vld [vmem:[#allocation2 + $0x98] sm:$0xff]
        %v552 = vld [vmem:[#allocation2 + $0xa0] sm:$0xff]
        %v553 = vld [vmem:[#allocation2 + $0xa8] sm:$0xff]
        %v554 = vld [vmem:[#allocation2 + $0xb0] sm:$0xff]
        %v555 = vld [vmem:[#allocation2 + $0xb8] sm:$0xff]
        %v556 = vld [vmem:[%s3] sm:$0xff]
        %v557 = vld [vmem:[%s3 + $0x8] sm:$0xff]
        %v558 = vld [vmem:[%s3 + $0x10] sm:$0xff]
        %v559 = vld [vmem:[%s3 + $0x18] sm:$0xff]
        %561 = vset.pattern.permute.xlu0 0
        %562 = vperm.xlu0 %561, %v556
        %v563 = vpop.permute.xlu0 %562
        %566 = vset.pattern.permute.xlu0 0
        %567 = vperm.xlu0 %566, %v557
        %v568 = vpop.permute.xlu0 %567
        %571 = vset.pattern.permute.xlu0 0
        %572 = vperm.xlu0 %571, %v558
        %v573 = vpop.permute.xlu0 %572
        %576 = vset.pattern.permute.xlu0 0
        %577 = vperm.xlu0 %576, %v559
        %v578 = vpop.permute.xlu0 %577
        %v584 = vunpack.c.l.b16 %v528
        %v585 = vunpack.c.l.b16 %v529
        %v586 = vunpack.c.l.b16 %v530
        %v587 = vunpack.c.l.b16 %v531
        %v588 = vpack.c.b16 %v585, %v584
        %v589 = vpack.c.b16 %v587, %v586
        %vm590 = vcmask 392192
        %v592 = vsel %vm590, %v588, 0
        %v595 = vsel %vm590, %v589, 0
        %597 = vmatprep.subr.bf16.mxu0 %v533
        %598 = vmatpush1.bf16.msra.mxu0 %v532
        %599 = vmatprep.subr.bf16.mxu0 %v541
        %600 = vmatpush1.bf16.msra.mxu0 %v540
        %601 = vmatprep.subr.bf16.mxu0 %v549
        %602 = vmatpush1.bf16.msra.mxu0 %v548
        %603 = vmatprep.subr.bf16.mxu0 0
        %604 = vmatpush1.bf16.msra.mxu0 0
        %605 = vmatprep.subr.bf16.mxu0 0
        %606 = vmatpush1.bf16.msra.mxu0 0
        %607 = vmatprep.subr.bf16.mxu0 0
        %608 = vmatpush1.bf16.msra.mxu0 0
        %609 = vmatprep.subr.bf16.mxu0 0
        %610 = vmatpush1.bf16.msra.mxu0 0
        %611 = vmatprep.subr.bf16.mxu0 0
        %612 = vmatpush1.bf16.msra.mxu0 0
        %613 = vmatprep.subr.bf16.mxu0 0
        %614 = vmatpush1.bf16.msra.mxu0 0
        %615 = vmatprep.subr.bf16.mxu0 0
        %616 = vmatpush1.bf16.msra.mxu0 0
        %617 = vmatprep.subr.bf16.mxu0 0
        %618 = vmatpush1.bf16.msra.mxu0 0
        %619 = vmatprep.subr.bf16.mxu0 0
        %620 = vmatpush1.bf16.msra.mxu0 0
        %621 = vmatprep.subr.bf16.mxu0 0
        %622 = vmatpush1.bf16.msra.mxu0 0
        %623 = vmatprep.subr.bf16.mxu0 0
        %624 = vmatpush1.bf16.msra.mxu0 0
        %625 = vmatprep.subr.bf16.mxu0 0
        %626 = vmatpush1.bf16.msra.mxu0 0
        %627 = vmatprep.subr.bf16.mxu0 0
        %628 = vmatpush1.bf16.msra.mxu0 0
        %629 = vmatprep.mubr.bf16.mxu0 0
        %630 = vmatmul.mubr.bf16.gmra.mrb[0].mxu0 %v592
        %v631 = vpop.f32.mrb[0].mxu0
        %v632 = vadd.f32 %v563, %v631
        %v633 = vpop.f32.mrb[0].mxu0
        %v634 = vadd.f32 %v563, %v633
        %v635 = vpop.f32.mrb[0].mxu0
        %v636 = vadd.f32 %v568, %v635
        %v637 = vpop.f32.mrb[0].mxu0
        %v638 = vadd.f32 %v568, %v637
        %639 = vmatprep.mubr.bf16.mxu0 0
        %640 = vmatmul.mubr.bf16.gmra.mrb[0].mxu0 %v595
        %v641 = vpop.f32.mrb[0].mxu0
        %v642 = vadd.f32 %v573, %v641
        %v643 = vpop.f32.mrb[0].mxu0
        %v644 = vadd.f32 %v573, %v643
        %v645 = vpop.f32.mrb[0].mxu0
        %v646 = vadd.f32 %v578, %v645
        %v647 = vpop.f32.mrb[0].mxu0
        %v648 = vadd.f32 %v578, %v647
        %649 = vdwg.mxu0
        %650 = vmatprep.subr.bf16.mxu0 %v535
        %651 = vmatpush1.bf16.msra.mxu0 %v534
        %652 = vmatprep.subr.bf16.mxu0 %v543
        %653 = vmatpush1.bf16.msra.mxu0 %v542
        %654 = vmatprep.subr.bf16.mxu0 %v551
        %655 = vmatpush1.bf16.msra.mxu0 %v550
        %656 = vmatprep.subr.bf16.mxu0 0
        %657 = vmatpush1.bf16.msra.mxu0 0
        %658 = vmatprep.subr.bf16.mxu0 0
        %659 = vmatpush1.bf16.msra.mxu0 0
        %660 = vmatprep.subr.bf16.mxu0 0
        %661 = vmatpush1.bf16.msra.mxu0 0
        %662 = vmatprep.subr.bf16.mxu0 0
        %663 = vmatpush1.bf16.msra.mxu0 0
        %664 = vmatprep.subr.bf16.mxu0 0
        %665 = vmatpush1.bf16.msra.mxu0 0
        %666 = vmatprep.subr.bf16.mxu0 0
        %667 = vmatpush1.bf16.msra.mxu0 0
        %668 = vmatprep.subr.bf16.mxu0 0
        %669 = vmatpush1.bf16.msra.mxu0 0
        %670 = vmatprep.subr.bf16.mxu0 0
        %671 = vmatpush1.bf16.msra.mxu0 0
        %672 = vmatprep.subr.bf16.mxu0 0
        %673 = vmatpush1.bf16.msra.mxu0 0
        %674 = vmatprep.subr.bf16.mxu0 0
        %675 = vmatpush1.bf16.msra.mxu0 0
        %676 = vmatprep.subr.bf16.mxu0 0
        %677 = vmatpush1.bf16.msra.mxu0 0
        %678 = vmatprep.subr.bf16.mxu0 0
        %679 = vmatpush1.bf16.msra.mxu0 0
        %680 = vmatprep.subr.bf16.mxu0 0
        %681 = vmatpush1.bf16.msra.mxu0 0
        %682 = vmatprep.mubr.bf16.mxu0 0
        %683 = vmatmul.mubr.bf16.gmra.mrb[0].mxu0 %v592
        %v684 = vpop.f32.mrb[0].mxu0
        %v685 = vadd.f32 %v563, %v684
        %v686 = vpop.f32.mrb[0].mxu0
        %v687 = vadd.f32 %v563, %v686
        %v688 = vpop.f32.mrb[0].mxu0
        %v689 = vadd.f32 %v568, %v688
        %v690 = vpop.f32.mrb[0].mxu0
        %v691 = vadd.f32 %v568, %v690
        %692 = vmatprep.mubr.bf16.mxu0 0
        %693 = vmatmul.mubr.bf16.gmra.mrb[0].mxu0 %v595
        %v694 = vpop.f32.mrb[0].mxu0
        %v695 = vadd.f32 %v573, %v694
        %v696 = vpop.f32.mrb[0].mxu0
        %v697 = vadd.f32 %v573, %v696
        %v698 = vpop.f32.mrb[0].mxu0
        %v699 = vadd.f32 %v578, %v698
        %v700 = vpop.f32.mrb[0].mxu0
        %v701 = vadd.f32 %v578, %v700
        %702 = vdwg.mxu0
        %703 = vmatprep.subr.bf16.mxu0 %v537
        %704 = vmatpush1.bf16.msra.mxu0 %v536
        %705 = vmatprep.subr.bf16.mxu0 %v545
        %706 = vmatpush1.bf16.msra.mxu0 %v544
        %707 = vmatprep.subr.bf16.mxu0 %v553
        %708 = vmatpush1.bf16.msra.mxu0 %v552
        %709 = vmatprep.subr.bf16.mxu0 0
        %710 = vmatpush1.bf16.msra.mxu0 0
        %711 = vmatprep.subr.bf16.mxu0 0
        %712 = vmatpush1.bf16.msra.mxu0 0
        %713 = vmatprep.subr.bf16.mxu0 0
        %714 = vmatpush1.bf16.msra.mxu0 0
        %715 = vmatprep.subr.bf16.mxu0 0
        %716 = vmatpush1.bf16.msra.mxu0 0
        %717 = vmatprep.subr.bf16.mxu0 0
        %718 = vmatpush1.bf16.msra.mxu0 0
        %719 = vmatprep.subr.bf16.mxu0 0
        %720 = vmatpush1.bf16.msra.mxu0 0
        %721 = vmatprep.subr.bf16.mxu0 0
        %722 = vmatpush1.bf16.msra.mxu0 0
        %723 = vmatprep.subr.bf16.mxu0 0
        %724 = vmatpush1.bf16.msra.mxu0 0
        %725 = vmatprep.subr.bf16.mxu0 0
        %726 = vmatpush1.bf16.msra.mxu0 0
        %727 = vmatprep.subr.bf16.mxu0 0
        %728 = vmatpush1.bf16.msra.mxu0 0
        %729 = vmatprep.subr.bf16.mxu0 0
        %730 = vmatpush1.bf16.msra.mxu0 0
        %731 = vmatprep.subr.bf16.mxu0 0
        %732 = vmatpush1.bf16.msra.mxu0 0
        %733 = vmatprep.subr.bf16.mxu0 0
        %734 = vmatpush1.bf16.msra.mxu0 0
        %735 = vmatprep.mubr.bf16.mxu0 0
        %736 = vmatmul.mubr.bf16.gmra.mrb[0].mxu0 %v592
        %v737 = vpop.f32.mrb[0].mxu0
        %v738 = vadd.f32 %v563, %v737
        %v739 = vpop.f32.mrb[0].mxu0
        %v740 = vadd.f32 %v563, %v739
        %v741 = vpop.f32.mrb[0].mxu0
        %v742 = vadd.f32 %v568, %v741
        %v743 = vpop.f32.mrb[0].mxu0
        %v744 = vadd.f32 %v568, %v743
        %745 = vmatprep.mubr.bf16.mxu0 0
        %746 = vmatmul.mubr.bf16.gmra.mrb[0].mxu0 %v595
        %v747 = vpop.f32.mrb[0].mxu0
        %v748 = vadd.f32 %v573, %v747
        %v749 = vpop.f32.mrb[0].mxu0
        %v750 = vadd.f32 %v573, %v749
        %v751 = vpop.f32.mrb[0].mxu0
        %v752 = vadd.f32 %v578, %v751
        %v753 = vpop.f32.mrb[0].mxu0
        %v754 = vadd.f32 %v578, %v753
        %755 = vdwg.mxu0
        %756 = vmatprep.subr.bf16.mxu0 %v539
        %757 = vmatpush1.bf16.msra.mxu0 %v538
        %758 = vmatprep.subr.bf16.mxu0 %v547
        %759 = vmatpush1.bf16.msra.mxu0 %v546
        %760 = vmatprep.subr.bf16.mxu0 %v555
        %761 = vmatpush1.bf16.msra.mxu0 %v554
        %762 = vmatprep.subr.bf16.mxu0 0
        %763 = vmatpush1.bf16.msra.mxu0 0
        %764 = vmatprep.subr.bf16.mxu0 0
        %765 = vmatpush1.bf16.msra.mxu0 0
        %766 = vmatprep.subr.bf16.mxu0 0
        %767 = vmatpush1.bf16.msra.mxu0 0
        %768 = vmatprep.subr.bf16.mxu0 0
        %769 = vmatpush1.bf16.msra.mxu0 0
        %770 = vmatprep.subr.bf16.mxu0 0
        %771 = vmatpush1.bf16.msra.mxu0 0
        %772 = vmatprep.subr.bf16.mxu0 0
        %773 = vmatpush1.bf16.msra.mxu0 0
        %774 = vmatprep.subr.bf16.mxu0 0
        %775 = vmatpush1.bf16.msra.mxu0 0
        %776 = vmatprep.subr.bf16.mxu0 0
        %777 = vmatpush1.bf16.msra.mxu0 0
        %778 = vmatprep.subr.bf16.mxu0 0
        %779 = vmatpush1.bf16.msra.mxu0 0
        %780 = vmatprep.subr.bf16.mxu0 0
        %781 = vmatpush1.bf16.msra.mxu0 0
        %782 = vmatprep.subr.bf16.mxu0 0
        %783 = vmatpush1.bf16.msra.mxu0 0
        %784 = vmatprep.subr.bf16.mxu0 0
        %785 = vmatpush1.bf16.msra.mxu0 0
        %786 = vmatprep.subr.bf16.mxu0 0
        %787 = vmatpush1.bf16.msra.mxu0 0
        %788 = vmatprep.mubr.bf16.mxu0 0
        %789 = vmatmul.mubr.bf16.gmra.mrb[0].mxu0 %v592
        %v790 = vpop.f32.mrb[0].mxu0
        %v791 = vadd.f32 %v563, %v790
        %v792 = vpop.f32.mrb[0].mxu0
        %v793 = vadd.f32 %v563, %v792
        %v794 = vpop.f32.mrb[0].mxu0
        %v795 = vadd.f32 %v568, %v794
        %v796 = vpop.f32.mrb[0].mxu0
        %v797 = vadd.f32 %v568, %v796
        %798 = vmatprep.mubr.bf16.mxu0 0
        %799 = vmatmul.mubr.bf16.gmra.mrb[0].mxu0 %v595
        %v800 = vpop.f32.mrb[0].mxu0
        %v801 = vadd.f32 %v573, %v800
        %v802 = vpop.f32.mrb[0].mxu0
        %v803 = vadd.f32 %v573, %v802
        %v804 = vpop.f32.mrb[0].mxu0
        %v805 = vadd.f32 %v578, %v804
        %v806 = vpop.f32.mrb[0].mxu0
        %v807 = vadd.f32 %v578, %v806
        %808 = vdwg.mxu0
        %v809 = vpack.c.bf16 %v636, %v632
        %v810 = vpack.c.bf16 %v638, %v634
        %v811 = vpack.c.bf16 %v689, %v685
        %v812 = vpack.c.bf16 %v691, %v687
        %v813 = vpack.c.bf16 %v742, %v738
        %v814 = vpack.c.bf16 %v744, %v740
        %v815 = vpack.c.bf16 %v795, %v791
        %v816 = vpack.c.bf16 %v797, %v793
        %v817 = vpack.c.bf16 %v646, %v642
        %v818 = vpack.c.bf16 %v648, %v644
        %v819 = vpack.c.bf16 %v699, %v695
        %v820 = vpack.c.bf16 %v701, %v697
        %v821 = vpack.c.bf16 %v752, %v748
        %v822 = vpack.c.bf16 %v754, %v750
        %v823 = vpack.c.bf16 %v805, %v801
        %v824 = vpack.c.bf16 %v807, %v803
        %v841 = vunpack.c.l.b16 %v809
        %v842 = vunpack.c.l.b16 %v810
        %v843 = vunpack.c.l.b16 %v811
        %v844 = vunpack.c.l.b16 %v812
        %v845 = vunpack.c.l.b16 %v813
        %v846 = vunpack.c.l.b16 %v814
        %v847 = vunpack.c.l.b16 %v815
        %v848 = vunpack.c.l.b16 %v816
        %v849 = vunpack.c.h.b16 %v809
        %v850 = vunpack.c.h.b16 %v810
        %v851 = vunpack.c.h.b16 %v811
        %v852 = vunpack.c.h.b16 %v812
        %v853 = vunpack.c.h.b16 %v813
        %v854 = vunpack.c.h.b16 %v814
        %v855 = vunpack.c.h.b16 %v815
        %v856 = vunpack.c.h.b16 %v816
        %v857 = vunpack.c.l.b16 %v817
        %v858 = vunpack.c.l.b16 %v818
        %v859 = vunpack.c.l.b16 %v819
        %v860 = vunpack.c.l.b16 %v820
        %v861 = vunpack.c.l.b16 %v821
        %v862 = vunpack.c.l.b16 %v822
        %v863 = vunpack.c.l.b16 %v823
        %v864 = vunpack.c.l.b16 %v824
        %v865 = vunpack.c.h.b16 %v817
        %v866 = vunpack.c.h.b16 %v818
        %v867 = vunpack.c.h.b16 %v819
        %v868 = vunpack.c.h.b16 %v820
        %v869 = vunpack.c.h.b16 %v821
        %v870 = vunpack.c.h.b16 %v822
        %v871 = vunpack.c.h.b16 %v823
        %v872 = vunpack.c.h.b16 %v824
        %v873 = vpack.c.b16 %v842, %v841
        %v874 = vpack.c.b16 %v844, %v843
        %v875 = vpack.c.b16 %v846, %v845
        %v876 = vpack.c.b16 %v848, %v847
        %v877 = vpack.c.b16 %v850, %v849
        %v878 = vpack.c.b16 %v852, %v851
        %v879 = vpack.c.b16 %v854, %v853
        %v880 = vpack.c.b16 %v856, %v855
        %v881 = vpack.c.b16 %v858, %v857
        %v882 = vpack.c.b16 %v860, %v859
        %v883 = vpack.c.b16 %v862, %v861
        %v884 = vpack.c.b16 %v864, %v863
        %v885 = vpack.c.b16 %v866, %v865
        %v886 = vpack.c.b16 %v868, %v867
        %v887 = vpack.c.b16 %v870, %v869
        %v888 = vpack.c.b16 %v872, %v871
        %905 = vst [vmem:[%s280] sm:$0xff] %v873
        %906 = vst [vmem:[%s280 + $0x8] sm:$0xff] %v874
        %907 = vst [vmem:[%s280 + $0x10] sm:$0xff] %v875
        %908 = vst [vmem:[%s280 + $0x18] sm:$0xff] %v876
        %909 = vst [vmem:[%s280 + $0x20] sm:$0xff] %v877
        %910 = vst [vmem:[%s280 + $0x28] sm:$0xff] %v878
        %911 = vst [vmem:[%s280 + $0x30] sm:$0xff] %v879
        %912 = vst [vmem:[%s280 + $0x38] sm:$0xff] %v880
        %913 = vst [vmem:[%s280 + $0x40] sm:$0xff] %v881
        %914 = vst [vmem:[%s280 + $0x48] sm:$0xff] %v882
        %915 = vst [vmem:[%s280 + $0x50] sm:$0xff] %v883
        %916 = vst [vmem:[%s280 + $0x58] sm:$0xff] %v884
        %917 = vst [vmem:[%s280 + $0x60] sm:$0xff] %v885
        %918 = vst [vmem:[%s280 + $0x68] sm:$0xff] %v886
        %919 = vst [vmem:[%s280 + $0x70] sm:$0xff] %v887
        %920 = vst [vmem:[%s280 + $0x78] sm:$0xff] %v888
        %s921 = sand.u32 %s146, 1
        %s922 = scalar_lea.sflag [#allocation5], %s921
        %s923 = sand.u32 %s146, 1
        %s924 = smul.addr %s923, 128
        %s925 = scalar_lea.vmem [#allocation8], %s924
        // Predicated region
        $region45: #{tpu_custom_call.1} parent=35 // pred_check
          %p926 = pneg %p156
        $region46: #{tpu_custom_call.1} parent=35 // pred_check_branch
          %928 = sbr.rel (%p926) target = $region48
        $region47: #{tpu_custom_call.1} parent=35 // pred_region
          %s929 = smul.u32 8, %s29
          %s931 = ssub.s32 2048, 2048
          %932 = vsyncadd %s922, %s931
          %s933 = smul.addr %s28, 64
          %s934 = sadd.s32 %s929, %s933
          %s935 = smul.addr %s934, 64
          %s936 = scalar_lea.hbm %s4, %s935
          %s937 = sshll.u32 %s925, 4
          %s938 = int_to_ptr.vmem [resolvable:$true] %s937
          %943 = dma.vmem_to_hbm [thread:$0]  %s938, 2048, %s936, %s922, 512, 1024, 32
        $region48: #{tpu_custom_call.1} parent=35 // pred_fallthru
          _
      $region36: #{tpu_custom_call.1} parent=5 // pred_fallthru
        _
      %p944 = scmp.le.s32.totalorder 2, %s19
      // Predicated region
      $region49: #{tpu_custom_call.1} parent=5 // pred_check
        %p945 = pneg %p944
      $region50: #{tpu_custom_call.1} parent=5 // pred_check_branch
        %947 = sbr.rel (%p945) target = $region52
      $region51: #{tpu_custom_call.1} parent=5 // pred_region
        %s948 = ssub.s32 %s19, 2
        // Predicated region
        $region53: #{tpu_custom_call.1} parent=51 // pred_check
          %p949 = pneg %p162
        $region54: #{tpu_custom_call.1} parent=51 // pred_check_branch
          %951 = sbr.rel (%p949) target = $region56
        $region55: #{tpu_custom_call.1} parent=51 // pred_region
          %s952 = sand.u32 %s147, 1
          %s953 = scalar_lea.sflag [#allocation5], %s952
          %s954 = sand.u32 %s147, 1
          %s955 = smul.addr %s954, 128
          %s956 = scalar_lea.vmem [#allocation8], %s955
          %957 = dma.done %s953, 2048
        $region56: #{tpu_custom_call.1} parent=51 // pred_fallthru
          _
      $region52: #{tpu_custom_call.1} parent=5 // pred_fallthru
        _
    $region6: #{tpu_custom_call.1} parent=1 // loop_footer
      %s23 = sadd.s32 1, %s19
    $region7: #{tpu_custom_call.1} parent=1 // loop_footer_branch
      %18 = sbr.rel target = $region3
    $region8: #{tpu_custom_call.1} parent=1 // loop_exit
      _
    %958 = vsyncpa [#allocation4], 1
    %s959 = scalar_lea.sflag [#allocation4], 1
    %960 = vsyncpa %s959, 1
    %961 = vsyncpa [#allocation7], 1
    %s962 = scalar_lea.sflag [#allocation7], 1
    %963 = vsyncpa %s962, 1
    %964 = vsyncpa [#allocation5], 1
    %s965 = scalar_lea.sflag [#allocation5], 1
    %966 = vsyncpa %s965, 1

</llo_original>
